<compile_context>
chip_gen: v7x
topology: tpu7x:2x2x1
jax: 0.10.0
libtpu: 0.0.40
codegen_flags: <defaults>
</compile_context>

<pallas_src>
import functools

import jax
import jax.numpy as jnp
from jax import lax
from jax.experimental import pallas as pl
from jax.experimental.pallas import tpu as pltpu

EPS = 1e-5
# v7x has 64 MiB physical VMEM per TensorCore; keep the scoped limit <= ~56 MiB
# so the same config never silently OOMs/spills there.  (v5e/v6e have 128 MiB
# and could be pushed toward 96-112 MiB if tiles or d_hid grow.)
VMEM_LIMIT_BYTES = 56 * 1024 * 1024


def _round_up(a, b):
    return ((a + b - 1) // b) * b


# --------------------------- kernel bodies ----------------------------------

def _fused_net_kernel(x_ref, w1_ref, g1_ref, be1_ref, w2_ref, g2_ref, be2_ref,
                      w3_ref, b3_ref, o_ref, *, inv_n, n_valid, mask_rows):
    """Whole network in one shot (full batch resident in VMEM).

    h1 = x@W1; bn1 stats in-kernel; a1 = relu(bn1(h1));
    h2 = a1@W2; bn2 stats in-kernel; a2 = relu(bn2(h2));
    out = a2@W3 + b3.
    Padded batch rows of x are zero, so they contribute nothing to the h1
    stats (fc1 has no bias); a1's padded rows are zeroed (when present) so
    they contribute nothing to the h2 stats either.
    """
    h1 = jnp.dot(x_ref[...], w1_ref[...], preferred_element_type=jnp.float32)
    m1 = jnp.sum(h1, axis=0, keepdims=True) * inv_n
    # NOTE: single-pass E[x^2]-E[x]^2 (clamped >= 0); fine at these activation
    # scales, switch to a two-pass/centered form if |mean| >> std ever holds.
    v1 = jnp.maximum(jnp.sum(h1 * h1, axis=0, keepdims=True) * inv_n - m1 * m1, 0.0)
    scale1 = g1_ref[...] * lax.rsqrt(v1 + EPS)
    shift1 = be1_ref[...] - m1 * scale1
    a1 = jnp.maximum(h1 * scale1 + shift1, 0.0)
    if mask_rows:
        row = lax.broadcasted_iota(jnp.int32, a1.shape, 0)
        a1 = jnp.where(row < n_valid, a1, 0.0)

    h2 = jnp.dot(a1.astype(w2_ref.dtype), w2_ref[...],
                 preferred_element_type=jnp.float32)
    m2 = jnp.sum(h2, axis=0, keepdims=True) * inv_n
    v2 = jnp.maximum(jnp.sum(h2 * h2, axis=0, keepdims=True) * inv_n - m2 * m2, 0.0)
    scale2 = g2_ref[...] * lax.rsqrt(v2 + EPS)
    shift2 = be2_ref[...] - m2 * scale2
    a2 = jnp.maximum(h2 * scale2 + shift2, 0.0)

    o = jnp.dot(a2.astype(w3_ref.dtype), w3_ref[...],
                preferred_element_type=jnp.float32) + b3_ref[...]
    o_ref[...] = o.astype(o_ref.dtype)


def _linear_stats_kernel(x_ref, w_ref, h_ref, sum_ref, ssq_ref):
    """h = x @ W ; emit this tile's per-column sum / sum-of-squares of h.

    sum_ref/ssq_ref are per-tile blocks (grid-indexed), so the grid axis is
    safely 'parallel' (megacore); the wrapper reduces over tiles.  Padded
    batch rows of x are zero -> zero rows of h -> no stat contamination.
    """
    h = jnp.dot(x_ref[...], w_ref[...], preferred_element_type=jnp.float32)
    h_ref[...] = h.astype(h_ref.dtype)
    sum_ref[...] = jnp.sum(h, axis=0, keepdims=True)
    ssq_ref[...] = jnp.sum(h * h, axis=0, keepdims=True)


def _bn_relu_linear_stats_kernel(h_ref, scale_ref, shift_ref, w_ref,
                                 sum_ref, ssq_ref, *, last_valid, mask_last):
    """a = relu(h*scale + shift); o = a @ W; emit per-tile sum/sumsq(o).

    o itself is NOT written to HBM (pass 3 recomputes it).  Padded batch rows
    only exist on the final tile; only there do we overwrite the partial stats
    with a masked version (pl.when), so all other tiles skip the iota/select.
    """
    a = jnp.maximum(
        h_ref[...].astype(jnp.float32) * scale_ref[...] + shift_ref[...], 0.0)
    o = jnp.dot(a.astype(w_ref.dtype), w_ref[...],
                preferred_element_type=jnp.float32)
    sum_ref[...] = jnp.sum(o, axis=0, keepdims=True)
    ssq_ref[...] = jnp.sum(o * o, axis=0, keepdims=True)

    if mask_last:
        @pl.when(pl.program_id(0) == pl.num_programs(0) - 1)
        def _():
            row = lax.broadcasted_iota(jnp.int32, o.shape, 0)
            om = jnp.where(row < last_valid, o, 0.0)
            sum_ref[...] = jnp.sum(om, axis=0, keepdims=True)
            ssq_ref[...] = jnp.sum(om * om, axis=0, keepdims=True)


def _bn_relu_mlp_head_kernel(h_ref, s1_ref, t1_ref, w2_ref,
                             s2_ref, t2_ref, w3_ref, b3_ref, o_ref):
    """a1 = relu(h1*s1+t1); h2 = a1@W2; a2 = relu(h2*s2+t2); out = a2@W3 + b3.

    h2 is recomputed in VMEM (never stored), removing a full HBM write+read.
    Lane-dense padded output columns; padded batch rows are sliced away by
    the wrapper so they need no masking here.
    """
    a1 = jnp.maximum(
        h_ref[...].astype(jnp.float32) * s1_ref[...] + t1_ref[...], 0.0)
    h2 = jnp.dot(a1.astype(w2_ref.dtype), w2_ref[...],
                 preferred_element_type=jnp.float32)
    a2 = jnp.maximum(h2 * s2_ref[...] + t2_ref[...], 0.0)
    o = jnp.dot(a2.astype(w3_ref.dtype), w3_ref[...],
                preferred_element_type=jnp.float32) + b3_ref[...]
    o_ref[...] = o.astype(o_ref.dtype)


# ------------------------------ wrapper --------------------------------------

def _stats_to_scale_shift(s, ssq, n, gamma, beta):
    # Training-mode BN: batch mean and biased batch variance; fold into
    # per-column scale/shift so the in-kernel work is one mul + one add.
    mean = s / n
    var = jnp.maximum(ssq / n - mean * mean, 0.0)
    scale = gamma * lax.rsqrt(var + EPS)
    shift = beta - mean * scale
    return scale, shift


def net_forward(x, params, *, max_tile_n=2048, use_bf16=False):
    (w1, g1, b1, w2, g2, b2, w3, bias3) = params
    n, d_in = x.shape
    d_hid = w1.shape[1]
    d_out = w3.shape[1]

    # bf16 operands recommended on v6e/v7x (native bf16 MXU, halves HBM bytes);
    # keep f32 on v5e.  Accumulation and BN math stay f32 either way.
    mm_dtype = jnp.bfloat16 if use_bf16 else jnp.float32   # matmul operands
    act_dtype = jnp.bfloat16 if use_bf16 else jnp.float32  # h1 HBM storage

    # Batch tiling: 1-D grid over rows.  Padded x rows are zero; since fc1 has
    # no bias, zero rows of x produce zero rows of h1 and do not perturb the
    # layer-1 batch statistics (we divide by the true N).
    tile_n = min(max_tile_n, _round_up(n, 8))
    n_pad = _round_up(n, tile_n)
    n_tiles = n_pad // tile_n
    mask_rows = (n_pad != n)
    last_valid = n - (n_tiles - 1) * tile_n   # valid rows in the final tile

    x_p = jnp.pad(x, ((0, n_pad - n), (0, 0))).astype(mm_dtype)

    # Lane-dense output: pad d_out up to a multiple of 128 lanes, slice later.
    d_out_pad = _round_up(d_out, 128)
    w3_p = jnp.pad(w3, ((0, 0), (0, d_out_pad - d_out))).astype(mm_dtype)
    b3_p = jnp.pad(bias3, ((0, 0), (0, d_out_pad - d_out))).astype(jnp.float32)
    w1_c = w1.astype(mm_dtype)
    w2_c = w2.astype(mm_dtype)
    g1f = g1.astype(jnp.float32)
    b1f = b1.astype(jnp.float32)
    g2f = g2.astype(jnp.float32)
    b2f = b2.astype(jnp.float32)

    def batch_spec(d):
        return pl.BlockSpec((tile_n, d), lambda i: (i, 0))

    def resident(shape):
        # Constant block index -> DMA'd once, stays VMEM-resident across tiles.
        return pl.BlockSpec(shape, lambda i: (0,) * len(shape))

    cp_par = pltpu.CompilerParams(dimension_semantics=("parallel",),
                                  vmem_limit_bytes=VMEM_LIMIT_BYTES)

    # ---------------- single-tile fused fast path ----------------------------
    if n_tiles == 1:
        kern = functools.partial(_fused_net_kernel, inv_n=1.0 / n,
                                 n_valid=n, mask_rows=mask_rows)
        out_p = pl.pallas_call(
            kern,
            grid=(1,),
            in_specs=[batch_spec(d_in),
                      resident((d_in, d_hid)), resident((1, d_hid)), resident((1, d_hid)),
                      resident((d_hid, d_hid)), resident((1, d_hid)), resident((1, d_hid)),
                      resident((d_hid, d_out_pad)), resident((1, d_out_pad))],
            out_specs=batch_spec(d_out_pad),
            out_shape=jax.ShapeDtypeStruct((n_pad, d_out_pad), jnp.float32),
            compiler_params=cp_par,
        )(x_p, w1_c, g1f, b1f, w2_c, g2f, b2f, w3_p, b3_p)
        return out_p[:n, :d_out]

    # ---------------- multi-tile pipelined path ------------------------------
    # Per-tile partial BN stats (grid-indexed blocks) -> every pass can be
    # 'parallel' (v7x megacore safe); wrapper reduces over the tile axis.
    def stats_spec():
        return pl.BlockSpec((None, 1, d_hid), lambda i: (i, 0, 0))

    stats_shape = jax.ShapeDtypeStruct((n_tiles, 1, d_hid), jnp.float32)

    # ---- pass 1: h1 = x @ W1, per-tile sum / sumsq of h1 --------------------
    h1, s1p, q1p = pl.pallas_call(
        _linear_stats_kernel,
        grid=(n_tiles,),
        in_specs=[batch_spec(d_in), resident((d_in, d_hid))],
        out_specs=[batch_spec(d_hid), stats_spec(), stats_spec()],
        out_shape=[jax.ShapeDtypeStruct((n_pad, d_hid), act_dtype),
                   stats_shape, stats_shape],
        compiler_params=cp_par,
    )(x_p, w1_c)
    scale1, shift1 = _stats_to_scale_shift(
        jnp.sum(s1p, axis=0), jnp.sum(q1p, axis=0), n, g1f, b1f)

    # ---- pass 2: per-tile sum / sumsq of h2 = relu(bn1(h1)) @ W2 (h2 NOT stored)
    k2 = functools.partial(_bn_relu_linear_stats_kernel,
                           last_valid=last_valid, mask_last=mask_rows)
    s2p, q2p = pl.pallas_call(
        k2,
        grid=(n_tiles,),
        in_specs=[batch_spec(d_hid), resident((1, d_hid)), resident((1, d_hid)),
                  resident((d_hid, d_hid))],
        out_specs=[stats_spec(), stats_spec()],
        out_shape=[stats_shape, stats_shape],
        compiler_params=cp_par,
    )(h1, scale1, shift1, w2_c)
    scale2, shift2 = _stats_to_scale_shift(
        jnp.sum(s2p, axis=0), jnp.sum(q2p, axis=0), n, g2f, b2f)

    # ---- pass 3: out = relu(bn2(relu(bn1(h1)) @ W2)) @ W3 + b3 --------------
    out_p = pl.pallas_call(
        _bn_relu_mlp_head_kernel,
        grid=(n_tiles,),
        in_specs=[batch_spec(d_hid), resident((1, d_hid)), resident((1, d_hid)),
                  resident((d_hid, d_hid)), resident((1, d_hid)), resident((1, d_hid)),
                  resident((d_hid, d_out_pad)), resident((1, d_out_pad))],
        out_specs=batch_spec(d_out_pad),
        out_shape=jax.ShapeDtypeStruct((n_pad, d_out_pad), jnp.float32),
        compiler_params=cp_par,
    )(h1, scale1, shift1, w2_c, scale2, shift2, w3_p, b3_p)

    return out_p[:n, :d_out]


# --------------------------- pure-JAX reference -------------------------------

def net_forward_ref(x, params):
    (w1, g1, b1, w2, g2, b2, w3, bias3) = params

    def bn_relu(h, g, b):
        m = jnp.mean(h, axis=0, keepdims=True)
        v = jnp.mean((h - m) ** 2, axis=0, keepdims=True)
        return jnp.maximum((h - m) / jnp.sqrt(v + EPS) * g + b, 0.0)

    h = bn_relu(x @ w1, g1, b1)
    h = bn_relu(h @ w2, g2, b2)
    return h @ w3 + bias3


def make_params(key, d_in, d_hid, d_out):
    k1, k2, k3, k4, k5, k6 = jax.random.split(key, 6)
    scale = 0.1
    w1 = scale * jax.random.normal(k1, (d_in, d_hid), jnp.float32)
    w2 = scale * jax.random.normal(k2, (d_hid, d_hid), jnp.float32)
    w3 = scale * jax.random.normal(k3, (d_hid, d_out), jnp.float32)
    bias3 = scale * jax.random.normal(k4, (1, d_out), jnp.float32)
    g1 = 1.0 + 0.05 * jax.random.normal(k5, (1, d_hid), jnp.float32)
    b1 = 0.05 * jax.random.normal(k6, (1, d_hid), jnp.float32)
    g2 = jnp.ones((1, d_hid), jnp.float32)
    b2 = jnp.zeros((1, d_hid), jnp.float32)
    return (w1, g1, b1, w2, g2, b2, w3, bias3)


if __name__ == "__main__":
    # Small shapes consistent with the module: batch=8, d_in=32, d_hid=64, d_out=16
    N, D_IN, D_HID, D_OUT = 8, 32, 64, 16

    key = jax.random.PRNGKey(0)
    kx, kp, kx2, kx3 = jax.random.split(key, 4)
    params = make_params(kp, D_IN, D_HID, D_OUT)

    # Case 1: single-tile fused fast path (exact fit, no padded rows).
    x = jax.random.normal(kx, (N, D_IN), jnp.float32)
    out = jax.block_until_ready(net_forward(x, params))
    ref = net_forward_ref(x, params)
    assert out.shape == (N, D_OUT)
    assert jnp.allclose(out, ref, atol=1e-4, rtol=1e-4), "case1 mismatch vs JAX reference"

    # Case 2: single-tile fused fast path with padded batch rows (masked stats).
    N2 = 6
    x2 = jax.random.normal(kx2, (N2, D_IN), jnp.float32)
    out2 = jax.block_until_ready(net_forward(x2, params))
    ref2 = net_forward_ref(x2, params)
    assert out2.shape == (N2, D_OUT)
    assert jnp.allclose(out2, ref2, atol=1e-4, rtol=1e-4), "case2 mismatch vs JAX reference"

    # Case 3: multi-tile path — per-tile partial BN stats, last-tile-only
    # masking, h2 recomputed (never written to HBM).
    N3 = 20
    x3 = jax.random.normal(kx3, (N3, D_IN), jnp.float32)
    out3 = jax.block_until_ready(net_forward(x3, params, max_tile_n=8))
    ref3 = net_forward_ref(x3, params)
    assert out3.shape == (N3, D_OUT)
    assert jnp.allclose(out3, ref3, atol=1e-4, rtol=1e-4), "case3 mismatch vs JAX reference"

    print("KERNEL_OK")
</pallas_src>

<mosaic_0001>
module attributes {stable_mosaic.version = 11 : i64} {
  func.func @_fused_net_kernel(%arg0: i32, %arg1: memref<8x32xf32, #tpu.memory_space<vmem>>, %arg2: memref<32x64xf32, #tpu.memory_space<vmem>>, %arg3: memref<1x64xf32, #tpu.memory_space<vmem>>, %arg4: memref<1x64xf32, #tpu.memory_space<vmem>>, %arg5: memref<64x64xf32, #tpu.memory_space<vmem>>, %arg6: memref<1x64xf32, #tpu.memory_space<vmem>>, %arg7: memref<1x64xf32, #tpu.memory_space<vmem>>, %arg8: memref<64x128xf32, #tpu.memory_space<vmem>>, %arg9: memref<1x128xf32, #tpu.memory_space<vmem>>, %arg10: memref<8x128xf32, #tpu.memory_space<vmem>>) attributes {dimension_semantics = [#tpu.dimension_semantics<parallel>], iteration_bounds = array<i64: 1>, scalar_prefetch = 0 : i64, scratch_operands = 0 : i64, tpu.core_type = #tpu.core_type<tc>, window_params = [{transform_indices = @transform_0, window_bounds = array<i64: 8, 32>}, {pipeline_mode = #tpu.pipeline_mode<synchronous>, transform_indices = @transform_1, window_bounds = array<i64: 32, 64>}, {pipeline_mode = #tpu.pipeline_mode<synchronous>, transform_indices = @transform_2, window_bounds = array<i64: 1, 64>}, {pipeline_mode = #tpu.pipeline_mode<synchronous>, transform_indices = @transform_3, window_bounds = array<i64: 1, 64>}, {pipeline_mode = #tpu.pipeline_mode<synchronous>, transform_indices = @transform_4, window_bounds = array<i64: 64, 64>}, {pipeline_mode = #tpu.pipeline_mode<synchronous>, transform_indices = @transform_5, window_bounds = array<i64: 1, 64>}, {pipeline_mode = #tpu.pipeline_mode<synchronous>, transform_indices = @transform_6, window_bounds = array<i64: 1, 64>}, {pipeline_mode = #tpu.pipeline_mode<synchronous>, transform_indices = @transform_7, window_bounds = array<i64: 64, 128>}, {pipeline_mode = #tpu.pipeline_mode<synchronous>, transform_indices = @transform_8, window_bounds = array<i64: 1, 128>}, {transform_indices = @transform_9, window_bounds = array<i64: 8, 128>}]} {
    %c0 = arith.constant 0 : index
    %c0_0 = arith.constant 0 : index
    %0 = vector.load %arg1[%c0, %c0_0] : memref<8x32xf32, #tpu.memory_space<vmem>>, vector<8x32xf32>
    %c0_1 = arith.constant 0 : index
    %c0_2 = arith.constant 0 : index
    %1 = vector.load %arg2[%c0_1, %c0_2] : memref<32x64xf32, #tpu.memory_space<vmem>>, vector<32x64xf32>
    %cst = arith.constant dense<0.000000e+00> : vector<8x64xf32>
    %2 = tpu.matmul %0, %1, %cst {dimension_numbers = #tpu.dot_dimension_numbers<[1], [0], [0], [1], [0, 0, 1, 1], [], []>} : vector<8x32xf32>, vector<32x64xf32>, vector<8x64xf32> -> vector<8x64xf32>
    %cst_3 = arith.constant dense<0.000000e+00> : vector<64xf32>
    %3 = vector.multi_reduction <add>, %2, %cst_3 [0] : vector<8x64xf32> to vector<64xf32>
    %4 = vector.shape_cast %3 : vector<64xf32> to vector<1x64xf32>
    %cst_4 = arith.constant 1.250000e-01 : f32
    %5 = vector.broadcast %cst_4 : f32 to vector<1x64xf32>
    %6 = arith.mulf %4, %5 : vector<1x64xf32>
    %7 = arith.mulf %2, %2 : vector<8x64xf32>
    %cst_5 = arith.constant dense<0.000000e+00> : vector<64xf32>
    %8 = vector.multi_reduction <add>, %7, %cst_5 [0] : vector<8x64xf32> to vector<64xf32>
    %9 = vector.shape_cast %8 : vector<64xf32> to vector<1x64xf32>
    %cst_6 = arith.constant 1.250000e-01 : f32
    %10 = vector.broadcast %cst_6 : f32 to vector<1x64xf32>
    %11 = arith.mulf %9, %10 : vector<1x64xf32>
    %12 = arith.mulf %6, %6 : vector<1x64xf32>
    %13 = arith.subf %11, %12 : vector<1x64xf32>
    %cst_7 = arith.constant 0.000000e+00 : f32
    %14 = vector.broadcast %cst_7 : f32 to vector<1x64xf32>
    %15 = arith.maximumf %13, %14 : vector<1x64xf32>
    %c0_8 = arith.constant 0 : index
    %c0_9 = arith.constant 0 : index
    %16 = vector.load %arg3[%c0_8, %c0_9] : memref<1x64xf32, #tpu.memory_space<vmem>>, vector<1x64xf32>
    %cst_10 = arith.constant 9.99999974E-6 : f32
    %17 = vector.broadcast %cst_10 : f32 to vector<1x64xf32>
    %18 = arith.addf %15, %17 : vector<1x64xf32>
    %19 = math.rsqrt %18 : vector<1x64xf32>
    %20 = arith.mulf %16, %19 : vector<1x64xf32>
    %c0_11 = arith.constant 0 : index
    %c0_12 = arith.constant 0 : index
    %21 = vector.load %arg4[%c0_11, %c0_12] : memref<1x64xf32, #tpu.memory_space<vmem>>, vector<1x64xf32>
    %22 = arith.mulf %6, %20 : vector<1x64xf32>
    %23 = arith.subf %21, %22 : vector<1x64xf32>
    %24 = vector.broadcast %20 : vector<1x64xf32> to vector<8x64xf32>
    %25 = arith.mulf %2, %24 : vector<8x64xf32>
    %26 = vector.broadcast %23 : vector<1x64xf32> to vector<8x64xf32>
    %27 = arith.addf %25, %26 : vector<8x64xf32>
    %cst_13 = arith.constant 0.000000e+00 : f32
    %28 = vector.broadcast %cst_13 : f32 to vector<8x64xf32>
    %29 = arith.maximumf %27, %28 : vector<8x64xf32>
    %c0_14 = arith.constant 0 : index
    %c0_15 = arith.constant 0 : index
    %30 = vector.load %arg5[%c0_14, %c0_15] : memref<64x64xf32, #tpu.memory_space<vmem>>, vector<64x64xf32>
    %cst_16 = arith.constant dense<0.000000e+00> : vector<8x64xf32>
    %31 = tpu.matmul %29, %30, %cst_16 {dimension_numbers = #tpu.dot_dimension_numbers<[1], [0], [0], [1], [0, 0, 1, 1], [], []>} : vector<8x64xf32>, vector<64x64xf32>, vector<8x64xf32> -> vector<8x64xf32>
    %cst_17 = arith.constant dense<0.000000e+00> : vector<64xf32>
    %32 = vector.multi_reduction <add>, %31, %cst_17 [0] : vector<8x64xf32> to vector<64xf32>
    %33 = vector.shape_cast %32 : vector<64xf32> to vector<1x64xf32>
    %cst_18 = arith.constant 1.250000e-01 : f32
    %34 = vector.broadcast %cst_18 : f32 to vector<1x64xf32>
    %35 = arith.mulf %33, %34 : vector<1x64xf32>
    %36 = arith.mulf %31, %31 : vector<8x64xf32>
    %cst_19 = arith.constant dense<0.000000e+00> : vector<64xf32>
    %37 = vector.multi_reduction <add>, %36, %cst_19 [0] : vector<8x64xf32> to vector<64xf32>
    %38 = vector.shape_cast %37 : vector<64xf32> to vector<1x64xf32>
    %cst_20 = arith.constant 1.250000e-01 : f32
    %39 = vector.broadcast %cst_20 : f32 to vector<1x64xf32>
    %40 = arith.mulf %38, %39 : vector<1x64xf32>
    %41 = arith.mulf %35, %35 : vector<1x64xf32>
    %42 = arith.subf %40, %41 : vector<1x64xf32>
    %cst_21 = arith.constant 0.000000e+00 : f32
    %43 = vector.broadcast %cst_21 : f32 to vector<1x64xf32>
    %44 = arith.maximumf %42, %43 : vector<1x64xf32>
    %c0_22 = arith.constant 0 : index
    %c0_23 = arith.constant 0 : index
    %45 = vector.load %arg6[%c0_22, %c0_23] : memref<1x64xf32, #tpu.memory_space<vmem>>, vector<1x64xf32>
    %cst_24 = arith.constant 9.99999974E-6 : f32
    %46 = vector.broadcast %cst_24 : f32 to vector<1x64xf32>
    %47 = arith.addf %44, %46 : vector<1x64xf32>
    %48 = math.rsqrt %47 : vector<1x64xf32>
    %49 = arith.mulf %45, %48 : vector<1x64xf32>
    %c0_25 = arith.constant 0 : index
    %c0_26 = arith.constant 0 : index
    %50 = vector.load %arg7[%c0_25, %c0_26] : memref<1x64xf32, #tpu.memory_space<vmem>>, vector<1x64xf32>
    %51 = arith.mulf %35, %49 : vector<1x64xf32>
    %52 = arith.subf %50, %51 : vector<1x64xf32>
    %53 = vector.broadcast %49 : vector<1x64xf32> to vector<8x64xf32>
    %54 = arith.mulf %31, %53 : vector<8x64xf32>
    %55 = vector.broadcast %52 : vector<1x64xf32> to vector<8x64xf32>
    %56 = arith.addf %54, %55 : vector<8x64xf32>
    %cst_27 = arith.constant 0.000000e+00 : f32
    %57 = vector.broadcast %cst_27 : f32 to vector<8x64xf32>
    %58 = arith.maximumf %56, %57 : vector<8x64xf32>
    %c0_28 = arith.constant 0 : index
    %c0_29 = arith.constant 0 : index
    %59 = vector.load %arg8[%c0_28, %c0_29] : memref<64x128xf32, #tpu.memory_space<vmem>>, vector<64x128xf32>
    %cst_30 = arith.constant dense<0.000000e+00> : vector<8x128xf32>
    %60 = tpu.matmul %58, %59, %cst_30 {dimension_numbers = #tpu.dot_dimension_numbers<[1], [0], [0], [1], [0, 0, 1, 1], [], []>} : vector<8x64xf32>, vector<64x128xf32>, vector<8x128xf32> -> vector<8x128xf32>
    %c0_31 = arith.constant 0 : index
    %c0_32 = arith.constant 0 : index
    %61 = vector.load %arg9[%c0_31, %c0_32] : memref<1x128xf32, #tpu.memory_space<vmem>>, vector<1x128xf32>
    %62 = vector.broadcast %61 : vector<1x128xf32> to vector<8x128xf32>
    %63 = arith.addf %60, %62 : vector<8x128xf32>
    %c0_33 = arith.constant 0 : index
    %c0_34 = arith.constant 0 : index
    %64 = vector.load %arg10[%c0_33, %c0_34] : memref<8x128xf32, #tpu.memory_space<vmem>>, vector<8x128xf32>
    tpu.vector_store %arg10[%c0_33, %c0_34], %63 {strides = array<i32>} : memref<8x128xf32, #tpu.memory_space<vmem>>, vector<8x128xf32>,
    return
  }
  func.func @transform_0(%arg0: i32) -> (i32, i32) {
    %c0_i32 = arith.constant 0 : i32
    %c0_i32_0 = arith.constant 0 : i32
    return %arg0, %c0_i32 : i32, i32
  }
  func.func @transform_1(%arg0: i32) -> (i32, i32) {
    %c0_i32 = arith.constant 0 : i32
    %c0_i32_0 = arith.constant 0 : i32
    %c0_i32_1 = arith.constant 0 : i32
    return %c0_i32, %c0_i32_0 : i32, i32
  }
  func.func @transform_2(%arg0: i32) -> (i32, i32) {
    %c0_i32 = arith.constant 0 : i32
    %c0_i32_0 = arith.constant 0 : i32
    %c0_i32_1 = arith.constant 0 : i32
    return %c0_i32, %c0_i32_0 : i32, i32
  }
  func.func @transform_3(%arg0: i32) -> (i32, i32) {
    %c0_i32 = arith.constant 0 : i32
    %c0_i32_0 = arith.constant 0 : i32
    %c0_i32_1 = arith.constant 0 : i32
    return %c0_i32, %c0_i32_0 : i32, i32
  }
  func.func @transform_4(%arg0: i32) -> (i32, i32) {
    %c0_i32 = arith.constant 0 : i32
    %c0_i32_0 = arith.constant 0 : i32
    %c0_i32_1 = arith.constant 0 : i32
    return %c0_i32, %c0_i32_0 : i32, i32
  }
  func.func @transform_5(%arg0: i32) -> (i32, i32) {
    %c0_i32 = arith.constant 0 : i32
    %c0_i32_0 = arith.constant 0 : i32
    %c0_i32_1 = arith.constant 0 : i32
    return %c0_i32, %c0_i32_0 : i32, i32
  }
  func.func @transform_6(%arg0: i32) -> (i32, i32) {
    %c0_i32 = arith.constant 0 : i32
    %c0_i32_0 = arith.constant 0 : i32
    %c0_i32_1 = arith.constant 0 : i32
    return %c0_i32, %c0_i32_0 : i32, i32
  }
  func.func @transform_7(%arg0: i32) -> (i32, i32) {
    %c0_i32 = arith.constant 0 : i32
    %c0_i32_0 = arith.constant 0 : i32
    %c0_i32_1 = arith.constant 0 : i32
    return %c0_i32, %c0_i32_0 : i32, i32
  }
  func.func @transform_8(%arg0: i32) -> (i32, i32) {
    %c0_i32 = arith.constant 0 : i32
    %c0_i32_0 = arith.constant 0 : i32
    %c0_i32_1 = arith.constant 0 : i32
    return %c0_i32, %c0_i32_0 : i32, i32
  }
  func.func @transform_9(%arg0: i32) -> (i32, i32) {
    %c0_i32 = arith.constant 0 : i32
    %c0_i32_0 = arith.constant 0 : i32
    return %arg0, %c0_i32 : i32, i32
  }
}

</mosaic_0001>

<llo_original>
// kernel: tpu_custom_call.1
$region0: #{tpu_custom_call.1}
  #allocation0 [shape = 'u32[]', space=smem, size = 0x4, offset = 0x4, fixed_abs, tag = 'smem constant byte address 0x4 - core index']
  #allocation1 [shape = 'u32[144,128]{1,0:T(1,128)}', space=vmem, size = 0x12000, scoped, tag = 'internal scratch']
  %s0 = inlined_call_operand.hbm [shape: f32[8,32], index: 0, kind: input, shape index: {}]
  %s1 = inlined_call_operand.hbm [shape: f32[32,64], index: 1, kind: input, shape index: {}]
  %s2 = inlined_call_operand.vmem [shape: f32[1,64], index: 2, kind: input, shape index: {}]
  %s3 = inlined_call_operand.vmem [shape: f32[1,64], index: 3, kind: input, shape index: {}]
  %s4 = inlined_call_operand.hbm [shape: f32[64,64], index: 4, kind: input, shape index: {}]
  %s5 = inlined_call_operand.vmem [shape: f32[1,64], index: 5, kind: input, shape index: {}]
  %s6 = inlined_call_operand.vmem [shape: f32[1,64], index: 6, kind: input, shape index: {}]
  %s7 = inlined_call_operand.hbm [shape: f32[64,128], index: 7, kind: input, shape index: {}]
  %s8 = inlined_call_operand.vmem [shape: f32[1,128], index: 8, kind: input, shape index: {}]
  %s9 = inlined_call_operand.hbm [shape: f32[8,128], index: 9, kind: output, shape index: {}]
  %s10 = sld [smem:[#allocation0]]
  $region62: #{tpu_custom_call.1} parent=0
    _
  %s12 = ssub.s32 1, %s10
  %s13 = scalar_select 0, %s12, %s10
  $region1: #{tpu_custom_call.1} parent=0
    #allocation2 [shape = 'u8[4096]{0}', space=vmem, size = 0x1000, scoped, tag = 'input window, operand 0, single buffered']
    #allocation3 [shape = 's32[1]{0}', space=sflag, size = 0x4, scoped, tag = 'scoped memory for tpu_custom_call.1']
    #allocation4 [shape = 's32[1]{0}', space=sflag, size = 0x4, scoped, tag = 'scoped memory for tpu_custom_call.1']
    #allocation5 [shape = 'u8[16384]{0}', space=vmem, size = 0x4000, scoped, tag = 'input window, operand 1, single buffered']
    #allocation6 [shape = 's32[1]{0}', space=sflag, size = 0x4, scoped, tag = 'scoped memory for tpu_custom_call.1']
    #allocation7 [shape = 'u8[32768]{0}', space=vmem, size = 0x8000, scoped, tag = 'input window, operand 4, single buffered']
    #allocation8 [shape = 'u8[32768]{0}', space=vmem, size = 0x8000, scoped, tag = 'input window, operand 7, single buffered']
    #allocation9 [shape = 's32[1]{0}', space=sflag, size = 0x4, scoped, tag = 'scoped memory for tpu_custom_call.1']
    #allocation10 [shape = 'u8[4096]{0}', space=vmem, size = 0x1000, scoped, tag = 'output window, operand 0, single buffered']
    %14 = vsyncpa [#allocation3], 0
    %15 = vsyncpa [#allocation6], 0
    %16 = vsyncpa [#allocation9], 0
    %17 = vsyncpa [#allocation4], 0
    // Predicated region
    $region2: #{tpu_custom_call.1} parent=1 // pred_check
      _
    $region3: #{tpu_custom_call.1} parent=1 // pred_check_branch
      %19 = sbr.rel (0) target = $region5
    $region4: #{tpu_custom_call.1} parent=1 // pred_region
      %s21 = ssub.s32 128, 128
      %22 = vsyncadd [#allocation3], %s21
      %s24 = sshll.u32 [#allocation2], 4
      %s25 = int_to_ptr.vmem [resolvable:$true] %s24
      %27 = dma.hbm_to_vmem [thread:$0]  %s0, 128, %s25, [#allocation3]
    $region5: #{tpu_custom_call.1} parent=1 // pred_fallthru
      _
    // Predicated region
    $region6: #{tpu_custom_call.1} parent=1 // pred_check
      _
    $region7: #{tpu_custom_call.1} parent=1 // pred_check_branch
      %29 = sbr.rel (0) target = $region9
    $region8: #{tpu_custom_call.1} parent=1 // pred_region
      %s31 = ssub.s32 512, 512
      %32 = vsyncadd [#allocation6], %s31
      %s33 = sshll.u32 [#allocation5], 4
      %s34 = int_to_ptr.vmem [resolvable:$true] %s33
      %39 = dma.hbm_to_vmem [thread:$0]  %s1, 512, %s34, [#allocation6], 128, 128, 8
    $region9: #{tpu_custom_call.1} parent=1 // pred_fallthru
      _
    // Predicated region
    $region10: #{tpu_custom_call.1} parent=1 // pred_check
      _
    $region11: #{tpu_custom_call.1} parent=1 // pred_check_branch
      %41 = sbr.rel (0) target = $region13
    $region12: #{tpu_custom_call.1} parent=1 // pred_region
      _
    $region13: #{tpu_custom_call.1} parent=1 // pred_fallthru
      _
    // Predicated region
    $region14: #{tpu_custom_call.1} parent=1 // pred_check
      _
    $region15: #{tpu_custom_call.1} parent=1 // pred_check_branch
      %43 = sbr.rel (0) target = $region17
    $region16: #{tpu_custom_call.1} parent=1 // pred_region
      _
    $region17: #{tpu_custom_call.1} parent=1 // pred_fallthru
      _
    // Predicated region
    $region18: #{tpu_custom_call.1} parent=1 // pred_check
      _
    $region19: #{tpu_custom_call.1} parent=1 // pred_check_branch
      %45 = sbr.rel (0) target = $region21
    $region20: #{tpu_custom_call.1} parent=1 // pred_region
      %s47 = ssub.s32 1024, 1024
      %48 = vsyncadd [#allocation6], %s47
      %s49 = sshll.u32 [#allocation7], 4
      %s50 = int_to_ptr.vmem [resolvable:$true] %s49
      %55 = dma.hbm_to_vmem [thread:$0]  %s4, 1024, %s50, [#allocation6], 128, 128, 8
    $region21: #{tpu_custom_call.1} parent=1 // pred_fallthru
      _
    // Predicated region
    $region22: #{tpu_custom_call.1} parent=1 // pred_check
      _
    $region23: #{tpu_custom_call.1} parent=1 // pred_check_branch
      %57 = sbr.rel (0) target = $region25
    $region24: #{tpu_custom_call.1} parent=1 // pred_region
      _
    $region25: #{tpu_custom_call.1} parent=1 // pred_fallthru
      _
    // Predicated region
    $region26: #{tpu_custom_call.1} parent=1 // pred_check
      _
    $region27: #{tpu_custom_call.1} parent=1 // pred_check_branch
      %59 = sbr.rel (0) target = $region29
    $region28: #{tpu_custom_call.1} parent=1 // pred_region
      _
    $region29: #{tpu_custom_call.1} parent=1 // pred_fallthru
      _
    // Predicated region
    $region30: #{tpu_custom_call.1} parent=1 // pred_check
      _
    $region31: #{tpu_custom_call.1} parent=1 // pred_check_branch
      %61 = sbr.rel (0) target = $region33
    $region32: #{tpu_custom_call.1} parent=1 // pred_region
      %s63 = ssub.s32 1024, 1024
      %64 = vsyncadd [#allocation9], %s63
      %s65 = sshll.u32 [#allocation8], 4
      %s66 = int_to_ptr.vmem [resolvable:$true] %s65
      %71 = dma.hbm_to_vmem [thread:$0]  %s7, 1024, %s66, [#allocation9], 128, 128, 8
    $region33: #{tpu_custom_call.1} parent=1 // pred_fallthru
      _
    // Predicated region
    $region34: #{tpu_custom_call.1} parent=1 // pred_check
      _
    $region35: #{tpu_custom_call.1} parent=1 // pred_check_branch
      %73 = sbr.rel (0) target = $region37
    $region36: #{tpu_custom_call.1} parent=1 // pred_region
      _
    $region37: #{tpu_custom_call.1} parent=1 // pred_fallthru
      _
    // Predicated region
    $region38: #{tpu_custom_call.1} parent=1 // pred_check
      _
    $region39: #{tpu_custom_call.1} parent=1 // pred_check_branch
      %75 = sbr.rel (0) target = $region41
    $region40: #{tpu_custom_call.1} parent=1 // pred_region
      %76 = dma.done [#allocation3], 128
    $region41: #{tpu_custom_call.1} parent=1 // pred_fallthru
      _
    // Predicated region
    $region42: #{tpu_custom_call.1} parent=1 // pred_check
      _
    $region43: #{tpu_custom_call.1} parent=1 // pred_check_branch
      %78 = sbr.rel (0) target = $region45
    $region44: #{tpu_custom_call.1} parent=1 // pred_region
      %79 = dma.done [#allocation6], 512
    $region45: #{tpu_custom_call.1} parent=1 // pred_fallthru
      _
    // Predicated region
    $region46: #{tpu_custom_call.1} parent=1 // pred_check
      _
    $region47: #{tpu_custom_call.1} parent=1 // pred_check_branch
      %81 = sbr.rel (0) target = $region49
    $region48: #{tpu_custom_call.1} parent=1 // pred_region
      %82 = dma.done [#allocation6], 1024
    $region49: #{tpu_custom_call.1} parent=1 // pred_fallthru
      _
    // Predicated region
    $region50: #{tpu_custom_call.1} parent=1 // pred_check
      _
    $region51: #{tpu_custom_call.1} parent=1 // pred_check_branch
      %84 = sbr.rel (0) target = $region53
    $region52: #{tpu_custom_call.1} parent=1 // pred_region
      %85 = dma.done [#allocation9], 1024
    $region53: #{tpu_custom_call.1} parent=1 // pred_fallthru
      _
    %v86 = vld [vmem:[#allocation2] sm:$0xff]
    %v87 = vld [vmem:[#allocation5] sm:$0xff]
    %v88 = vld [vmem:[#allocation5 + $0x8] sm:$0xff]
    %v89 = vld [vmem:[#allocation5 + $0x10] sm:$0xff]
    %v90 = vld [vmem:[#allocation5 + $0x18] sm:$0xff]
    %vm91 = vcmask 261120
    %v93 = vsel %vm91, %v86, 0
    %95 = vmatprep.subr.mxu0 0.0
    %96 = vmatpush1.msra.mxu0 %v87
    %97 = vmatprep.subr.mxu0 0.0
    %98 = vmatpush1.msra.mxu0 %v88
    %99 = vmatprep.subr.mxu0 0.0
    %100 = vmatpush1.msra.mxu0 %v89
    %101 = vmatprep.subr.mxu0 0.0
    %102 = vmatpush1.msra.mxu0 %v90
    %103 = vmatprep.subr.mxu0 0.0
    %104 = vmatpush1.msra.mxu0 0.0
    %105 = vmatprep.subr.mxu0 0.0
    %106 = vmatpush1.msra.mxu0 0.0
    %107 = vmatprep.subr.mxu0 0.0
    %108 = vmatpush1.msra.mxu0 0.0
    %109 = vmatprep.subr.mxu0 0.0
    %110 = vmatpush1.msra.mxu0 0.0
    %111 = vmatprep.subr.mxu0 0.0
    %112 = vmatpush1.msra.mxu0 0.0
    %113 = vmatprep.subr.mxu0 0.0
    %114 = vmatpush1.msra.mxu0 0.0
    %115 = vmatprep.subr.mxu0 0.0
    %116 = vmatpush1.msra.mxu0 0.0
    %117 = vmatprep.subr.mxu0 0.0
    %118 = vmatpush1.msra.mxu0 0.0
    %119 = vmatprep.subr.mxu0 0.0
    %120 = vmatpush1.msra.mxu0 0.0
    %121 = vmatprep.subr.mxu0 0.0
    %122 = vmatpush1.msra.mxu0 0.0
    %123 = vmatprep.subr.mxu0 0.0
    %124 = vmatpush1.msra.mxu0 0.0
    %125 = vmatprep.subr.mxu0 0.0
    %126 = vmatpush1.msra.mxu0 0.0
    %127 = vmatprep.subr.mxu0 0.0
    %128 = vmatpush1.msra.mxu0 0.0
    %129 = vmatprep.subr.mxu0 0.0
    %130 = vmatpush1.msra.mxu0 0.0
    %131 = vmatprep.subr.mxu0 0.0
    %132 = vmatpush1.msra.mxu0 0.0
    %133 = vmatprep.subr.mxu0 0.0
    %134 = vmatpush1.msra.mxu0 0.0
    %135 = vmatprep.subr.mxu0 0.0
    %136 = vmatpush1.msra.mxu0 0.0
    %137 = vmatprep.subr.mxu0 0.0
    %138 = vmatpush1.msra.mxu0 0.0
    %139 = vmatprep.subr.mxu0 0.0
    %140 = vmatpush1.msra.mxu0 0.0
    %141 = vmatprep.subr.mxu0 0.0
    %142 = vmatpush1.msra.mxu0 0.0
    %143 = vmatprep.subr.mxu0 0.0
    %144 = vmatpush1.msra.mxu0 0.0
    %145 = vmatprep.subr.mxu0 0.0
    %146 = vmatpush1.msra.mxu0 0.0
    %147 = vmatprep.subr.mxu0 0.0
    %148 = vmatpush1.msra.mxu0 0.0
    %149 = vmatprep.subr.mxu0 0.0
    %150 = vmatpush1.msra.mxu0 0.0
    %151 = vmatprep.subr.mxu0 0.0
    %152 = vmatpush1.msra.mxu0 0.0
    %153 = vmatprep.subr.mxu0 0.0
    %154 = vmatpush1.msra.mxu0 0.0
    %155 = vmatprep.subr.mxu0 0.0
    %156 = vmatpush1.msra.mxu0 0.0
    %157 = vmatprep.subr.mxu0 0.0
    %158 = vmatpush1.msra.mxu0 0.0
    %159 = vmatprep.mubr.f32.mxu0 0.0
    %160 = vmatmul.mubr.f32.gmra.mrb[0].mxu0 %v93
    %v161 = vpop.f32.mrb[0].mxu0
    %v162 = vadd.f32 0.0, %v161
    %v163 = vpop.f32.mrb[0].mxu0
    %164 = vdwg.mxu0
    %vm165 = vcmask 523264
    %v166 = vsel %vm165, %v162, 0.0
    %v167 = vrot.slane %v166, 4
    %v168 = vadd.f32 %v166, %v167
    %v169 = vrot.slane %v168, 2
    %v170 = vadd.f32 %v168, %v169
    %v171 = vrot.slane %v170, 1
    %v172 = vadd.f32 %v170, %v171
    %v173 = vmul.f32 %v172, 0.125
    %v174 = vmul.f32 %v162, %v162
    %v175 = vsel %vm165, %v174, 0.0
    %v176 = vrot.slane %v175, 4
    %v177 = vadd.f32 %v175, %v176
    %v178 = vrot.slane %v177, 2
    %v179 = vadd.f32 %v177, %v178
    %v180 = vrot.slane %v179, 1
    %v181 = vadd.f32 %v179, %v180
    %v182 = vmul.f32 %v181, 0.125
    %v183 = vmul.f32 %v173, %v173
    %v184 = vsub.f32 %v182, %v183
    %v185 = vmax.f32 %v184, 0.0
    %v186 = vld [vmem:[%s2] sm:$0x1]
    %v187 = vadd.f32 %v185, 1e-05
    %v188 = vrsqrt.pop %v187
    %v189 = vmul.f32 %v186, %v188
    %v190 = vld [vmem:[%s3] sm:$0x1]
    %v191 = vmul.f32 %v173, %v189
    %v192 = vsub.f32 %v190, %v191
    %v194 = vlaneseq
    %v195 = vshrl.u32 %v194, 7
    %v196 = vsub.s32 0, %v195
    %v197 = vrot.slane %v189, %v196
    %v199 = vmul.f32 %v162, %v197
    %v201 = vlaneseq
    %v202 = vshrl.u32 %v201, 7
    %v203 = vsub.s32 0, %v202
    %v204 = vrot.slane %v192, %v203
    %v206 = vadd.f32 %v199, %v204
    %v207 = vmax.f32 %v206, 0.0
    %v208 = vld [vmem:[#allocation7] sm:$0xff]
    %v209 = vld [vmem:[#allocation7 + $0x8] sm:$0xff]
    %v210 = vld [vmem:[#allocation7 + $0x10] sm:$0xff]
    %v211 = vld [vmem:[#allocation7 + $0x18] sm:$0xff]
    %v212 = vld [vmem:[#allocation7 + $0x20] sm:$0xff]
    %v213 = vld [vmem:[#allocation7 + $0x28] sm:$0xff]
    %v214 = vld [vmem:[#allocation7 + $0x30] sm:$0xff]
    %v215 = vld [vmem:[#allocation7 + $0x38] sm:$0xff]
    %v217 = vsel %vm165, %v207, 0
    %219 = vmatprep.subr.mxu0 0.0
    %220 = vmatpush1.msra.mxu0 %v208
    %221 = vmatprep.subr.mxu0 0.0
    %222 = vmatpush1.msra.mxu0 %v209
    %223 = vmatprep.subr.mxu0 0.0
    %224 = vmatpush1.msra.mxu0 %v210
    %225 = vmatprep.subr.mxu0 0.0
    %226 = vmatpush1.msra.mxu0 %v211
    %227 = vmatprep.subr.mxu0 0.0
    %228 = vmatpush1.msra.mxu0 %v212
    %229 = vmatprep.subr.mxu0 0.0
    %230 = vmatpush1.msra.mxu0 %v213
    %231 = vmatprep.subr.mxu0 0.0
    %232 = vmatpush1.msra.mxu0 %v214
    %233 = vmatprep.subr.mxu0 0.0
    %234 = vmatpush1.msra.mxu0 %v215
    %235 = vmatprep.subr.mxu0 0.0
    %236 = vmatpush1.msra.mxu0 0.0
    %237 = vmatprep.subr.mxu0 0.0
    %238 = vmatpush1.msra.mxu0 0.0
    %239 = vmatprep.subr.mxu0 0.0
    %240 = vmatpush1.msra.mxu0 0.0
    %241 = vmatprep.subr.mxu0 0.0
    %242 = vmatpush1.msra.mxu0 0.0
    %243 = vmatprep.subr.mxu0 0.0
    %244 = vmatpush1.msra.mxu0 0.0
    %245 = vmatprep.subr.mxu0 0.0
    %246 = vmatpush1.msra.mxu0 0.0
    %247 = vmatprep.subr.mxu0 0.0
    %248 = vmatpush1.msra.mxu0 0.0
    %249 = vmatprep.subr.mxu0 0.0
    %250 = vmatpush1.msra.mxu0 0.0
    %251 = vmatprep.subr.mxu0 0.0
    %252 = vmatpush1.msra.mxu0 0.0
    %253 = vmatprep.subr.mxu0 0.0
    %254 = vmatpush1.msra.mxu0 0.0
    %255 = vmatprep.subr.mxu0 0.0
    %256 = vmatpush1.msra.mxu0 0.0
    %257 = vmatprep.subr.mxu0 0.0
    %258 = vmatpush1.msra.mxu0 0.0
    %259 = vmatprep.subr.mxu0 0.0
    %260 = vmatpush1.msra.mxu0 0.0
    %261 = vmatprep.subr.mxu0 0.0
    %262 = vmatpush1.msra.mxu0 0.0
    %263 = vmatprep.subr.mxu0 0.0
    %264 = vmatpush1.msra.mxu0 0.0
    %265 = vmatprep.subr.mxu0 0.0
    %266 = vmatpush1.msra.mxu0 0.0
    %267 = vmatprep.subr.mxu0 0.0
    %268 = vmatpush1.msra.mxu0 0.0
    %269 = vmatprep.subr.mxu0 0.0
    %270 = vmatpush1.msra.mxu0 0.0
    %271 = vmatprep.subr.mxu0 0.0
    %272 = vmatpush1.msra.mxu0 0.0
    %273 = vmatprep.subr.mxu0 0.0
    %274 = vmatpush1.msra.mxu0 0.0
    %275 = vmatprep.subr.mxu0 0.0
    %276 = vmatpush1.msra.mxu0 0.0
    %277 = vmatprep.subr.mxu0 0.0
    %278 = vmatpush1.msra.mxu0 0.0
    %279 = vmatprep.subr.mxu0 0.0
    %280 = vmatpush1.msra.mxu0 0.0
    %281 = vmatprep.subr.mxu0 0.0
    %282 = vmatpush1.msra.mxu0 0.0
    %283 = vmatprep.mubr.f32.mxu0 0.0
    %284 = vmatmul.mubr.f32.gmra.mrb[0].mxu0 %v217
    %v285 = vpop.f32.mrb[0].mxu0
    %v286 = vadd.f32 0.0, %v285
    %v287 = vpop.f32.mrb[0].mxu0
    %288 = vdwg.mxu0
    %v289 = vsel %vm165, %v286, 0.0
    %v290 = vrot.slane %v289, 4
    %v291 = vadd.f32 %v289, %v290
    %v292 = vrot.slane %v291, 2
    %v293 = vadd.f32 %v291, %v292
    %v294 = vrot.slane %v293, 1
    %v295 = vadd.f32 %v293, %v294
    %v296 = vmul.f32 %v295, 0.125
    %v297 = vmul.f32 %v286, %v286
    %v298 = vsel %vm165, %v297, 0.0
    %v299 = vrot.slane %v298, 4
    %v300 = vadd.f32 %v298, %v299
    %v301 = vrot.slane %v300, 2
    %v302 = vadd.f32 %v300, %v301
    %v303 = vrot.slane %v302, 1
    %v304 = vadd.f32 %v302, %v303
    %v305 = vmul.f32 %v304, 0.125
    %v306 = vmul.f32 %v296, %v296
    %v307 = vsub.f32 %v305, %v306
    %v308 = vmax.f32 %v307, 0.0
    %v309 = vld [vmem:[%s5] sm:$0x1]
    %v310 = vadd.f32 %v308, 1e-05
    %v311 = vrsqrt.pop %v310
    %v312 = vmul.f32 %v309, %v311
    %v313 = vld [vmem:[%s6] sm:$0x1]
    %v314 = vmul.f32 %v296, %v312
    %v315 = vsub.f32 %v313, %v314
    %v317 = vlaneseq
    %v318 = vshrl.u32 %v317, 7
    %v319 = vsub.s32 0, %v318
    %v320 = vrot.slane %v312, %v319
    %v322 = vmul.f32 %v286, %v320
    %v324 = vlaneseq
    %v325 = vshrl.u32 %v324, 7
    %v326 = vsub.s32 0, %v325
    %v327 = vrot.slane %v315, %v326
    %v329 = vadd.f32 %v322, %v327
    %v330 = vmax.f32 %v329, 0.0
    %v331 = vld [vmem:[#allocation8] sm:$0xff]
    %v332 = vld [vmem:[#allocation8 + $0x8] sm:$0xff]
    %v333 = vld [vmem:[#allocation8 + $0x10] sm:$0xff]
    %v334 = vld [vmem:[#allocation8 + $0x18] sm:$0xff]
    %v335 = vld [vmem:[#allocation8 + $0x20] sm:$0xff]
    %v336 = vld [vmem:[#allocation8 + $0x28] sm:$0xff]
    %v337 = vld [vmem:[#allocation8 + $0x30] sm:$0xff]
    %v338 = vld [vmem:[#allocation8 + $0x38] sm:$0xff]
    %v339 = vld [vmem:[%s8] sm:$0x1]
    %v341 = vlaneseq
    %v342 = vshrl.u32 %v341, 7
    %v343 = vsub.s32 0, %v342
    %v344 = vrot.slane %v339, %v343
    %v347 = vsel %vm165, %v330, 0
    %349 = vmatprep.subr.mxu0 0.0
    %350 = vmatpush1.msra.mxu0 %v331
    %351 = vmatprep.subr.mxu0 0.0
    %352 = vmatpush1.msra.mxu0 %v332
    %353 = vmatprep.subr.mxu0 0.0
    %354 = vmatpush1.msra.mxu0 %v333
    %355 = vmatprep.subr.mxu0 0.0
    %356 = vmatpush1.msra.mxu0 %v334
    %357 = vmatprep.subr.mxu0 0.0
    %358 = vmatpush1.msra.mxu0 %v335
    %359 = vmatprep.subr.mxu0 0.0
    %360 = vmatpush1.msra.mxu0 %v336
    %361 = vmatprep.subr.mxu0 0.0
    %362 = vmatpush1.msra.mxu0 %v337
    %363 = vmatprep.subr.mxu0 0.0
    %364 = vmatpush1.msra.mxu0 %v338
    %365 = vmatprep.subr.mxu0 0.0
    %366 = vmatpush1.msra.mxu0 0.0
    %367 = vmatprep.subr.mxu0 0.0
    %368 = vmatpush1.msra.mxu0 0.0
    %369 = vmatprep.subr.mxu0 0.0
    %370 = vmatpush1.msra.mxu0 0.0
    %371 = vmatprep.subr.mxu0 0.0
    %372 = vmatpush1.msra.mxu0 0.0
    %373 = vmatprep.subr.mxu0 0.0
    %374 = vmatpush1.msra.mxu0 0.0
    %375 = vmatprep.subr.mxu0 0.0
    %376 = vmatpush1.msra.mxu0 0.0
    %377 = vmatprep.subr.mxu0 0.0
    %378 = vmatpush1.msra.mxu0 0.0
    %379 = vmatprep.subr.mxu0 0.0
    %380 = vmatpush1.msra.mxu0 0.0
    %381 = vmatprep.subr.mxu0 0.0
    %382 = vmatpush1.msra.mxu0 0.0
    %383 = vmatprep.subr.mxu0 0.0
    %384 = vmatpush1.msra.mxu0 0.0
    %385 = vmatprep.subr.mxu0 0.0
    %386 = vmatpush1.msra.mxu0 0.0
    %387 = vmatprep.subr.mxu0 0.0
    %388 = vmatpush1.msra.mxu0 0.0
    %389 = vmatprep.subr.mxu0 0.0
    %390 = vmatpush1.msra.mxu0 0.0
    %391 = vmatprep.subr.mxu0 0.0
    %392 = vmatpush1.msra.mxu0 0.0
    %393 = vmatprep.subr.mxu0 0.0
    %394 = vmatpush1.msra.mxu0 0.0
    %395 = vmatprep.subr.mxu0 0.0
    %396 = vmatpush1.msra.mxu0 0.0
    %397 = vmatprep.subr.mxu0 0.0
    %398 = vmatpush1.msra.mxu0 0.0
    %399 = vmatprep.subr.mxu0 0.0
    %400 = vmatpush1.msra.mxu0 0.0
    %401 = vmatprep.subr.mxu0 0.0
    %402 = vmatpush1.msra.mxu0 0.0
    %403 = vmatprep.subr.mxu0 0.0
    %404 = vmatpush1.msra.mxu0 0.0
    %405 = vmatprep.subr.mxu0 0.0
    %406 = vmatpush1.msra.mxu0 0.0
    %407 = vmatprep.subr.mxu0 0.0
    %408 = vmatpush1.msra.mxu0 0.0
    %409 = vmatprep.subr.mxu0 0.0
    %410 = vmatpush1.msra.mxu0 0.0
    %411 = vmatprep.subr.mxu0 0.0
    %412 = vmatpush1.msra.mxu0 0.0
    %413 = vmatprep.mubr.f32.mxu0 0.0
    %414 = vmatmul.mubr.f32.gmra.mrb[0].mxu0 %v347
    %v415 = vpop.f32.mrb[0].mxu0
    %v416 = vadd.f32 %v344, %v415
    %v417 = vpop.f32.mrb[0].mxu0
    %418 = vdwg.mxu0
    %419 = vst [vmem:[#allocation10] sm:$0xff] %v416
    // Predicated region
    $region54: #{tpu_custom_call.1} parent=1 // pred_check
      _
    $region55: #{tpu_custom_call.1} parent=1 // pred_check_branch
      %421 = sbr.rel (0) target = $region57
    $region56: #{tpu_custom_call.1} parent=1 // pred_region
      %s423 = ssub.s32 128, 128
      %424 = vsyncadd [#allocation4], %s423
      %s426 = sshll.u32 [#allocation10], 4
      %s427 = int_to_ptr.vmem [resolvable:$true] %s426
      %429 = dma.vmem_to_hbm [thread:$0]  %s427, 128, %s9, [#allocation4]
    $region57: #{tpu_custom_call.1} parent=1 // pred_fallthru
      _
    // Predicated region
    $region58: #{tpu_custom_call.1} parent=1 // pred_check
      _
    $region59: #{tpu_custom_call.1} parent=1 // pred_check_branch
      %431 = sbr.rel (0) target = $region61
    $region60: #{tpu_custom_call.1} parent=1 // pred_region
      %432 = dma.done [#allocation4], 128
    $region61: #{tpu_custom_call.1} parent=1 // pred_fallthru
      _
    %433 = vsyncpa [#allocation3], 1
    %434 = vsyncpa [#allocation6], 1
    %435 = vsyncpa [#allocation9], 1
    %436 = vsyncpa [#allocation4], 1

</llo_original>
